<compile_context>
chip_gen: v7x
topology: tpu7x:2x2x1
jax: 0.10.0
libtpu: 0.0.40
codegen_flags: <defaults>
</compile_context>

<pallas_src>
import functools

import jax
import jax.numpy as jnp
from jax.experimental import pallas as pl
from jax.experimental.pallas import tpu as pltpu


def _mlp_kernel(x_ref,
                w1_ref, b1_ref,
                w2_ref, b2_ref,
                w3_ref, b3_ref,
                w4_ref, b4_ref,
                out_ref):
    # x tile arrives as f32; cast to bf16 in-kernel (VPU slot, hidden under MXU).
    x = x_ref[...].astype(jnp.bfloat16)

    # fc1 + tanh  (MXU bf16 -> f32 accumulate; bias/tanh in f32)
    h = jnp.dot(x, w1_ref[...], preferred_element_type=jnp.float32) + b1_ref[...]
    h = jnp.tanh(h)
    # dropout1 (p=0.2) is identity in eval mode

    # fc2 + tanh
    h = jnp.dot(h.astype(jnp.bfloat16), w2_ref[...],
                preferred_element_type=jnp.float32) + b2_ref[...]
    h = jnp.tanh(h)
    # dropout2 (p=0.2) is identity in eval mode

    # fc3 + tanh
    h = jnp.dot(h.astype(jnp.bfloat16), w3_ref[...],
                preferred_element_type=jnp.float32) + b3_ref[...]
    h = jnp.tanh(h)
    # dropout3 (p=0.2) is identity in eval mode

    # output layer (32 -> 1): an N=1 matmul wastes >99% of the MXU, so do it
    # as a broadcast-multiply + lane reduction on the VPU/XLU instead.
    logits = jnp.sum(h * w4_ref[...], axis=-1, keepdims=True) + b4_ref[...]
    out_ref[...] = jax.nn.sigmoid(logits).astype(out_ref.dtype)


def _round_up(v, m):
    return ((v + m - 1) // m) * m


def prepare_params(params):
    """One-time prep: bf16 MXU weight copies, f32 biases, (1, 32) output row."""
    return {
        "w1": params["w1"].astype(jnp.bfloat16),
        "w2": params["w2"].astype(jnp.bfloat16),
        "w3": params["w3"].astype(jnp.bfloat16),
        "w4": params["w4"].reshape(1, -1).astype(jnp.float32),  # (1, 32), stays f32
        "b1": params["b1"].astype(jnp.float32),
        "b2": params["b2"].astype(jnp.float32),
        "b3": params["b3"].astype(jnp.float32),
        "b4": params["b4"].astype(jnp.float32),
    }


@functools.partial(jax.jit, static_argnames=("block_b",))
def net_forward(x, prepared, *, block_b=4096):
    """x: (B, 24) float32; prepared: output of prepare_params(). Returns (B, 1) f32."""
    B = x.shape[0]

    # Batch tile: multiple of 8 (sublane), capped so that large batches produce
    # >= 2 grid tiles (v7x megacore), then capped at block_b.  Non-divisible
    # batches rely on Pallas partial-tile handling (no pad, no output slice).
    b8 = _round_up(B, 8)
    tb_cap = max(8, (b8 // 2) // 8 * 8) if b8 >= 16 else 8
    tb = max(8, (min(block_b, tb_cap) // 8) * 8)
    grid = (pl.cdiv(B, tb),)

    def resident(arr):
        # Full-extent block, constant index map -> DMA'd once, VMEM-resident
        # across every batch tile.
        return pl.BlockSpec(arr.shape, lambda i: (0,) * arr.ndim)

    out = pl.pallas_call(
        _mlp_kernel,
        out_shape=jax.ShapeDtypeStruct((B, 1), jnp.float32),
        grid_spec=pltpu.PrefetchScalarGridSpec(
            num_scalar_prefetch=0,
            grid=grid,
            in_specs=[
                pl.BlockSpec((tb, 24), lambda i: (i, 0)),   # x tile (f32, cast in-kernel)
                resident(prepared["w1"]), resident(prepared["b1"]),
                resident(prepared["w2"]), resident(prepared["b2"]),
                resident(prepared["w3"]), resident(prepared["b3"]),
                resident(prepared["w4"]), resident(prepared["b4"]),
            ],
            out_specs=pl.BlockSpec((tb, 1), lambda i: (i, 0)),
        ),
        compiler_params=pltpu.CompilerParams(
            # batch tiles are independent -> shard across v7x's 2 TensorCores
            dimension_semantics=("parallel",),
            # headroom for large f32 intermediates (v5e scoped default is 16 MiB)
            vmem_limit_bytes=32 * 1024 * 1024,
        ),
    )(x,
      prepared["w1"], prepared["b1"],
      prepared["w2"], prepared["b2"],
      prepared["w3"], prepared["b3"],
      prepared["w4"], prepared["b4"])

    return out


def init_params(key):
    """Deterministic synthetic init matching nn.Linear shapes (stored transposed)."""
    sizes = [(24, 128), (128, 64), (64, 32), (32, 1)]
    params = {}
    keys = jax.random.split(key, len(sizes) * 2)
    for i, (fan_in, fan_out) in enumerate(sizes):
        bound = 1.0 / jnp.sqrt(fan_in)
        w = jax.random.uniform(keys[2 * i], (fan_in, fan_out),
                               minval=-bound, maxval=bound, dtype=jnp.float32)
        b = jax.random.uniform(keys[2 * i + 1], (1, fan_out),
                               minval=-bound, maxval=bound, dtype=jnp.float32)
        params[f"w{i + 1}"] = w
        params[f"b{i + 1}"] = b
    return params


def _reference(x, params):
    h = jnp.tanh(x @ params["w1"] + params["b1"])
    h = jnp.tanh(h @ params["w2"] + params["b2"])
    h = jnp.tanh(h @ params["w3"] + params["b3"])
    return jax.nn.sigmoid(h @ params["w4"] + params["b4"])


if __name__ == "__main__":
    key = jax.random.PRNGKey(0)
    pkey, xkey = jax.random.split(key)
    params = init_params(pkey)
    prepared = prepare_params(params)   # bf16 weight copies made exactly once

    # Small-batch run (single tile, default block_b path).
    batch = 8
    x = jax.random.normal(xkey, (batch, 24), dtype=jnp.float32)
    out = jax.block_until_ready(net_forward(x, prepared))
    ref = _reference(x, params)
    assert out.shape == (batch, 1)
    # bf16 matmul operands with f32 accumulation -> loosened tolerance.
    assert jnp.allclose(out, ref, atol=2e-2), "mismatch vs reference (small batch)"

    # Multi-tile run exercising the batch grid + partial last tile
    # (TB=8, B=20 -> grid of 3 tiles, last tile has 4 valid rows, no padding).
    batch2 = 20
    x2 = jax.random.normal(jax.random.PRNGKey(1), (batch2, 24), dtype=jnp.float32)
    out2 = jax.block_until_ready(net_forward(x2, prepared, block_b=8))
    ref2 = _reference(x2, params)
    assert out2.shape == (batch2, 1)
    assert jnp.allclose(out2, ref2, atol=2e-2), "mismatch vs reference (tiled batch)"

    print("KERNEL_OK")
</pallas_src>

<mosaic_0001>
module attributes {stable_mosaic.version = 11 : i64} {
  func.func @_mlp_kernel(%arg0: i32, %arg1: memref<8x24xf32, #tpu.memory_space<vmem>>, %arg2: memref<24x128xbf16, #tpu.memory_space<vmem>>, %arg3: memref<1x128xf32, #tpu.memory_space<vmem>>, %arg4: memref<128x64xbf16, #tpu.memory_space<vmem>>, %arg5: memref<1x64xf32, #tpu.memory_space<vmem>>, %arg6: memref<64x32xbf16, #tpu.memory_space<vmem>>, %arg7: memref<1x32xf32, #tpu.memory_space<vmem>>, %arg8: memref<1x32xf32, #tpu.memory_space<vmem>>, %arg9: memref<1x1xf32, #tpu.memory_space<vmem>>, %arg10: memref<8x1xf32, #tpu.memory_space<vmem>>) attributes {dimension_semantics = [#tpu.dimension_semantics<parallel>], iteration_bounds = array<i64: 1>, scalar_prefetch = 0 : i64, scratch_operands = 0 : i64, tpu.core_type = #tpu.core_type<tc>, window_params = [{transform_indices = @transform_0, window_bounds = array<i64: 8, 24>}, {pipeline_mode = #tpu.pipeline_mode<synchronous>, transform_indices = @transform_1, window_bounds = array<i64: 24, 128>}, {pipeline_mode = #tpu.pipeline_mode<synchronous>, transform_indices = @transform_2, window_bounds = array<i64: 1, 128>}, {pipeline_mode = #tpu.pipeline_mode<synchronous>, transform_indices = @transform_3, window_bounds = array<i64: 128, 64>}, {pipeline_mode = #tpu.pipeline_mode<synchronous>, transform_indices = @transform_4, window_bounds = array<i64: 1, 64>}, {pipeline_mode = #tpu.pipeline_mode<synchronous>, transform_indices = @transform_5, window_bounds = array<i64: 64, 32>}, {pipeline_mode = #tpu.pipeline_mode<synchronous>, transform_indices = @transform_6, window_bounds = array<i64: 1, 32>}, {pipeline_mode = #tpu.pipeline_mode<synchronous>, transform_indices = @transform_7, window_bounds = array<i64: 1, 32>}, {pipeline_mode = #tpu.pipeline_mode<synchronous>, transform_indices = @transform_8, window_bounds = array<i64: 1, 1>}, {transform_indices = @transform_9, window_bounds = array<i64: 8, 1>}]} {
    %c0 = arith.constant 0 : index
    %c0_0 = arith.constant 0 : index
    %0 = vector.load %arg1[%c0, %c0_0] : memref<8x24xf32, #tpu.memory_space<vmem>>, vector<8x24xf32>
    %1 = arith.truncf %0 : vector<8x24xf32> to vector<8x24xbf16>
    %c0_1 = arith.constant 0 : index
    %c0_2 = arith.constant 0 : index
    %2 = vector.load %arg2[%c0_1, %c0_2] : memref<24x128xbf16, #tpu.memory_space<vmem>>, vector<24x128xbf16>
    %cst = arith.constant dense<0.000000e+00> : vector<8x128xf32>
    %3 = tpu.matmul %1, %2, %cst {dimension_numbers = #tpu.dot_dimension_numbers<[1], [0], [0], [1], [0, 0, 1, 1], [], []>} : vector<8x24xbf16>, vector<24x128xbf16>, vector<8x128xf32> -> vector<8x128xf32>
    %c0_3 = arith.constant 0 : index
    %c0_4 = arith.constant 0 : index
    %4 = vector.load %arg3[%c0_3, %c0_4] : memref<1x128xf32, #tpu.memory_space<vmem>>, vector<1x128xf32>
    %5 = vector.broadcast %4 : vector<1x128xf32> to vector<8x128xf32>
    %6 = arith.addf %3, %5 : vector<8x128xf32>
    %7 = math.tanh %6 : vector<8x128xf32>
    %8 = arith.truncf %7 : vector<8x128xf32> to vector<8x128xbf16>
    %c0_5 = arith.constant 0 : index
    %c0_6 = arith.constant 0 : index
    %9 = vector.load %arg4[%c0_5, %c0_6] : memref<128x64xbf16, #tpu.memory_space<vmem>>, vector<128x64xbf16>
    %cst_7 = arith.constant dense<0.000000e+00> : vector<8x64xf32>
    %10 = tpu.matmul %8, %9, %cst_7 {dimension_numbers = #tpu.dot_dimension_numbers<[1], [0], [0], [1], [0, 0, 1, 1], [], []>} : vector<8x128xbf16>, vector<128x64xbf16>, vector<8x64xf32> -> vector<8x64xf32>
    %c0_8 = arith.constant 0 : index
    %c0_9 = arith.constant 0 : index
    %11 = vector.load %arg5[%c0_8, %c0_9] : memref<1x64xf32, #tpu.memory_space<vmem>>, vector<1x64xf32>
    %12 = vector.broadcast %11 : vector<1x64xf32> to vector<8x64xf32>
    %13 = arith.addf %10, %12 : vector<8x64xf32>
    %14 = math.tanh %13 : vector<8x64xf32>
    %15 = arith.truncf %14 : vector<8x64xf32> to vector<8x64xbf16>
    %c0_10 = arith.constant 0 : index
    %c0_11 = arith.constant 0 : index
    %16 = vector.load %arg6[%c0_10, %c0_11] : memref<64x32xbf16, #tpu.memory_space<vmem>>, vector<64x32xbf16>
    %cst_12 = arith.constant dense<0.000000e+00> : vector<8x32xf32>
    %17 = tpu.matmul %15, %16, %cst_12 {dimension_numbers = #tpu.dot_dimension_numbers<[1], [0], [0], [1], [0, 0, 1, 1], [], []>} : vector<8x64xbf16>, vector<64x32xbf16>, vector<8x32xf32> -> vector<8x32xf32>
    %c0_13 = arith.constant 0 : index
    %c0_14 = arith.constant 0 : index
    %18 = vector.load %arg7[%c0_13, %c0_14] : memref<1x32xf32, #tpu.memory_space<vmem>>, vector<1x32xf32>
    %19 = vector.broadcast %18 : vector<1x32xf32> to vector<8x32xf32>
    %20 = arith.addf %17, %19 : vector<8x32xf32>
    %21 = math.tanh %20 : vector<8x32xf32>
    %c0_15 = arith.constant 0 : index
    %c0_16 = arith.constant 0 : index
    %22 = vector.load %arg8[%c0_15, %c0_16] : memref<1x32xf32, #tpu.memory_space<vmem>>, vector<1x32xf32>
    %23 = vector.broadcast %22 : vector<1x32xf32> to vector<8x32xf32>
    %24 = arith.mulf %21, %23 : vector<8x32xf32>
    %cst_17 = arith.constant dense<0.000000e+00> : vector<8xf32>
    %25 = vector.multi_reduction <add>, %24, %cst_17 [1] : vector<8x32xf32> to vector<8xf32>
    %26 = vector.shape_cast %25 : vector<8xf32> to vector<8x1xf32>
    %c0_18 = arith.constant 0 : index
    %c0_19 = arith.constant 0 : index
    %27 = vector.load %arg9[%c0_18, %c0_19] : memref<1x1xf32, #tpu.memory_space<vmem>>, vector<1x1xf32>
    %28 = vector.broadcast %27 : vector<1x1xf32> to vector<8x1xf32>
    %29 = arith.addf %26, %28 : vector<8x1xf32>
    %30 = arith.negf %29 : vector<8x1xf32>
    %31 = math.exp %30 : vector<8x1xf32>
    %cst_20 = arith.constant 1.000000e+00 : f32
    %32 = vector.broadcast %cst_20 : f32 to vector<8x1xf32>
    %33 = arith.addf %32, %31 : vector<8x1xf32>
    %34 = arith.divf %32, %33 : vector<8x1xf32>
    %c0_21 = arith.constant 0 : index
    %c0_22 = arith.constant 0 : index
    %35 = vector.load %arg10[%c0_21, %c0_22] : memref<8x1xf32, #tpu.memory_space<vmem>>, vector<8x1xf32>
    tpu.vector_store %arg10[%c0_21, %c0_22], %34 {strides = array<i32>} : memref<8x1xf32, #tpu.memory_space<vmem>>, vector<8x1xf32>,
    return
  }
  func.func @transform_0(%arg0: i32) -> (i32, i32) {
    %c0_i32 = arith.constant 0 : i32
    %c0_i32_0 = arith.constant 0 : i32
    return %arg0, %c0_i32 : i32, i32
  }
  func.func @transform_1(%arg0: i32) -> (i32, i32) {
    %c0_i32 = arith.constant 0 : i32
    %c0_i32_0 = arith.constant 0 : i32
    %c0_i32_1 = arith.constant 0 : i32
    return %c0_i32, %c0_i32_0 : i32, i32
  }
  func.func @transform_2(%arg0: i32) -> (i32, i32) {
    %c0_i32 = arith.constant 0 : i32
    %c0_i32_0 = arith.constant 0 : i32
    %c0_i32_1 = arith.constant 0 : i32
    return %c0_i32, %c0_i32_0 : i32, i32
  }
  func.func @transform_3(%arg0: i32) -> (i32, i32) {
    %c0_i32 = arith.constant 0 : i32
    %c0_i32_0 = arith.constant 0 : i32
    %c0_i32_1 = arith.constant 0 : i32
    return %c0_i32, %c0_i32_0 : i32, i32
  }
  func.func @transform_4(%arg0: i32) -> (i32, i32) {
    %c0_i32 = arith.constant 0 : i32
    %c0_i32_0 = arith.constant 0 : i32
    %c0_i32_1 = arith.constant 0 : i32
    return %c0_i32, %c0_i32_0 : i32, i32
  }
  func.func @transform_5(%arg0: i32) -> (i32, i32) {
    %c0_i32 = arith.constant 0 : i32
    %c0_i32_0 = arith.constant 0 : i32
    %c0_i32_1 = arith.constant 0 : i32
    return %c0_i32, %c0_i32_0 : i32, i32
  }
  func.func @transform_6(%arg0: i32) -> (i32, i32) {
    %c0_i32 = arith.constant 0 : i32
    %c0_i32_0 = arith.constant 0 : i32
    %c0_i32_1 = arith.constant 0 : i32
    return %c0_i32, %c0_i32_0 : i32, i32
  }
  func.func @transform_7(%arg0: i32) -> (i32, i32) {
    %c0_i32 = arith.constant 0 : i32
    %c0_i32_0 = arith.constant 0 : i32
    %c0_i32_1 = arith.constant 0 : i32
    return %c0_i32, %c0_i32_0 : i32, i32
  }
  func.func @transform_8(%arg0: i32) -> (i32, i32) {
    %c0_i32 = arith.constant 0 : i32
    %c0_i32_0 = arith.constant 0 : i32
    %c0_i32_1 = arith.constant 0 : i32
    return %c0_i32, %c0_i32_0 : i32, i32
  }
  func.func @transform_9(%arg0: i32) -> (i32, i32) {
    %c0_i32 = arith.constant 0 : i32
    %c0_i32_0 = arith.constant 0 : i32
    return %arg0, %c0_i32 : i32, i32
  }
}

</mosaic_0001>

<llo_original>
// kernel: net_forward.1
$region0: #{net_forward.1}
  #allocation0 [shape = 'u32[]', space=smem, size = 0x4, offset = 0x4, fixed_abs, tag = 'smem constant byte address 0x4 - core index']
  #allocation1 [shape = 'u32[144,128]{1,0:T(1,128)}', space=vmem, size = 0x12000, scoped, tag = 'internal scratch']
  #allocation2 [shape = 'f32[1,1]{1,0:T(1,128)S(1)}', space=vmem, size = 0x200, scoped, tag = 'scoped memory for net_forward.1']
  %s0 = inlined_call_operand.vmem [shape: f32[8,24], index: 0, kind: input, shape index: {}]
  %s1 = inlined_call_operand.vmem [shape: bf16[24,128], index: 1, kind: input, shape index: {}]
  %s2 = inlined_call_operand.vmem [shape: f32[1,128], index: 2, kind: input, shape index: {}]
  %s3 = inlined_call_operand.vmem [shape: bf16[128,64], index: 3, kind: input, shape index: {}]
  %s4 = inlined_call_operand.vmem [shape: f32[1,64], index: 4, kind: input, shape index: {}]
  %s5 = inlined_call_operand.vmem [shape: bf16[64,32], index: 5, kind: input, shape index: {}]
  %s6 = inlined_call_operand.vmem [shape: f32[1,32], index: 6, kind: input, shape index: {}]
  %s7 = inlined_call_operand.vmem [shape: f32[1,32], index: 7, kind: input, shape index: {}]
  %s8 = inlined_call_operand.<no memory space> [shape: f32[1,1], index: 8, kind: input, shape index: {}]
  %s9 = inlined_call_operand.vmem [shape: f32[8,1], index: 9, kind: output, shape index: {}]
  %s10 = sld [smem:[#allocation0]]
  $region46: #{net_forward.1} parent=0
    _
  %s12 = ssub.s32 1, %s10
  %s13 = scalar_select 0, %s12, %s10
  %v14 = vstv %s8
  %15 = vst [vmem:[#allocation2] sm:$0x1] %v14
  // Predicated region
  $region2: #{net_forward.1} parent=0 // pred_check
    _
  $region3: #{net_forward.1} parent=0 // pred_check_branch
    %17 = sbr.rel (0) target = $region5
  $region4: #{net_forward.1} parent=0 // pred_region
    _
  $region5: #{net_forward.1} parent=0 // pred_fallthru
    _
  // Predicated region
  $region6: #{net_forward.1} parent=0 // pred_check
    _
  $region7: #{net_forward.1} parent=0 // pred_check_branch
    %19 = sbr.rel (0) target = $region9
  $region8: #{net_forward.1} parent=0 // pred_region
    _
  $region9: #{net_forward.1} parent=0 // pred_fallthru
    _
  // Predicated region
  $region10: #{net_forward.1} parent=0 // pred_check
    _
  $region11: #{net_forward.1} parent=0 // pred_check_branch
    %21 = sbr.rel (0) target = $region13
  $region12: #{net_forward.1} parent=0 // pred_region
    _
  $region13: #{net_forward.1} parent=0 // pred_fallthru
    _
  // Predicated region
  $region14: #{net_forward.1} parent=0 // pred_check
    _
  $region15: #{net_forward.1} parent=0 // pred_check_branch
    %23 = sbr.rel (0) target = $region17
  $region16: #{net_forward.1} parent=0 // pred_region
    _
  $region17: #{net_forward.1} parent=0 // pred_fallthru
    _
  // Predicated region
  $region18: #{net_forward.1} parent=0 // pred_check
    _
  $region19: #{net_forward.1} parent=0 // pred_check_branch
    %25 = sbr.rel (0) target = $region21
  $region20: #{net_forward.1} parent=0 // pred_region
    _
  $region21: #{net_forward.1} parent=0 // pred_fallthru
    _
  // Predicated region
  $region22: #{net_forward.1} parent=0 // pred_check
    _
  $region23: #{net_forward.1} parent=0 // pred_check_branch
    %27 = sbr.rel (0) target = $region25
  $region24: #{net_forward.1} parent=0 // pred_region
    _
  $region25: #{net_forward.1} parent=0 // pred_fallthru
    _
  // Predicated region
  $region26: #{net_forward.1} parent=0 // pred_check
    _
  $region27: #{net_forward.1} parent=0 // pred_check_branch
    %29 = sbr.rel (0) target = $region29
  $region28: #{net_forward.1} parent=0 // pred_region
    _
  $region29: #{net_forward.1} parent=0 // pred_fallthru
    _
  // Predicated region
  $region30: #{net_forward.1} parent=0 // pred_check
    _
  $region31: #{net_forward.1} parent=0 // pred_check_branch
    %31 = sbr.rel (0) target = $region33
  $region32: #{net_forward.1} parent=0 // pred_region
    _
  $region33: #{net_forward.1} parent=0 // pred_fallthru
    _
  // Predicated region
  $region34: #{net_forward.1} parent=0 // pred_check
    _
  $region35: #{net_forward.1} parent=0 // pred_check_branch
    %33 = sbr.rel (0) target = $region37
  $region36: #{net_forward.1} parent=0 // pred_region
    _
  $region37: #{net_forward.1} parent=0 // pred_fallthru
    _
  %v35 = vld [vmem:[%s0] sm:$0xff]
  %v36 = vpack.c.bf16 %v35, %v35
  %v37 = vld [vmem:[%s1] sm:$0xf]
  %v38 = vld [vmem:[%s1 + $0x4] sm:$0xf]
  %v39 = vld [vmem:[%s1 + $0x8] sm:$0xf]
  %v40 = vld [vmem:[%s2] sm:$0x1]
  %v42 = vlaneseq
  %v43 = vshrl.u32 %v42, 7
  %v44 = vsub.s32 0, %v43
  %v45 = vrot.slane %v40, %v44
  %v50 = vunpack.c.l.b16 %v37
  %v51 = vunpack.c.l.b16 %v38
  %v52 = vunpack.c.l.b16 %v39
  %v53 = vpack.c.b16 %v51, %v50
  %v54 = vpack.c.b16 %v52, %v52
  %vm56 = vcmask 195584
  %v58 = vsel %vm56, %v36, 0
  %vm60 = vcmask 1043456
  %v62 = vsel %vm60, %v54, 0
  %64 = vmatprep.subr.bf16.mxu0 0
  %65 = vmatpush1.bf16.msra.mxu0 %v53
  %66 = vmatprep.subr.bf16.mxu0 0
  %67 = vmatpush1.bf16.msra.mxu0 %v62
  %68 = vmatprep.subr.bf16.mxu0 0
  %69 = vmatpush1.bf16.msra.mxu0 0
  %70 = vmatprep.subr.bf16.mxu0 0
  %71 = vmatpush1.bf16.msra.mxu0 0
  %72 = vmatprep.subr.bf16.mxu0 0
  %73 = vmatpush1.bf16.msra.mxu0 0
  %74 = vmatprep.subr.bf16.mxu0 0
  %75 = vmatpush1.bf16.msra.mxu0 0
  %76 = vmatprep.subr.bf16.mxu0 0
  %77 = vmatpush1.bf16.msra.mxu0 0
  %78 = vmatprep.subr.bf16.mxu0 0
  %79 = vmatpush1.bf16.msra.mxu0 0
  %80 = vmatprep.subr.bf16.mxu0 0
  %81 = vmatpush1.bf16.msra.mxu0 0
  %82 = vmatprep.subr.bf16.mxu0 0
  %83 = vmatpush1.bf16.msra.mxu0 0
  %84 = vmatprep.subr.bf16.mxu0 0
  %85 = vmatpush1.bf16.msra.mxu0 0
  %86 = vmatprep.subr.bf16.mxu0 0
  %87 = vmatpush1.bf16.msra.mxu0 0
  %88 = vmatprep.subr.bf16.mxu0 0
  %89 = vmatpush1.bf16.msra.mxu0 0
  %90 = vmatprep.subr.bf16.mxu0 0
  %91 = vmatpush1.bf16.msra.mxu0 0
  %92 = vmatprep.subr.bf16.mxu0 0
  %93 = vmatpush1.bf16.msra.mxu0 0
  %94 = vmatprep.subr.bf16.mxu0 0
  %95 = vmatpush1.bf16.msra.mxu0 0
  %96 = vmatprep.mubr.bf16.mxu0 0
  %97 = vmatmul.mubr.bf16.gmra.mrb[0].mxu0 %v58
  %v98 = vpop.f32.mrb[0].mxu0
  %v99 = vadd.f32 %v45, %v98
  %v100 = vpop.f32.mrb[0].mxu0
  %v101 = vpop.f32.mrb[0].mxu0
  %v102 = vpop.f32.mrb[0].mxu0
  %103 = vdwg.mxu0
  %v104 = vtanh.pop %v99
  %v105 = vpack.c.bf16 %v104, %v104
  %v106 = vld [vmem:[%s3] sm:$0xf]
  %v107 = vld [vmem:[%s3 + $0x4] sm:$0xf]
  %v108 = vld [vmem:[%s3 + $0x8] sm:$0xf]
  %v109 = vld [vmem:[%s3 + $0xc] sm:$0xf]
  %v110 = vld [vmem:[%s3 + $0x10] sm:$0xf]
  %v111 = vld [vmem:[%s3 + $0x14] sm:$0xf]
  %v112 = vld [vmem:[%s3 + $0x18] sm:$0xf]
  %v113 = vld [vmem:[%s3 + $0x1c] sm:$0xf]
  %v114 = vld [vmem:[%s3 + $0x20] sm:$0xf]
  %v115 = vld [vmem:[%s3 + $0x24] sm:$0xf]
  %v116 = vld [vmem:[%s3 + $0x28] sm:$0xf]
  %v117 = vld [vmem:[%s3 + $0x2c] sm:$0xf]
  %v118 = vld [vmem:[%s3 + $0x30] sm:$0xf]
  %v119 = vld [vmem:[%s3 + $0x34] sm:$0xf]
  %v120 = vld [vmem:[%s3 + $0x38] sm:$0xf]
  %v121 = vld [vmem:[%s3 + $0x3c] sm:$0xf]
  %v122 = vld [vmem:[%s4] sm:$0x1]
  %v124 = vlaneseq
  %v125 = vshrl.u32 %v124, 7
  %v126 = vsub.s32 0, %v125
  %v127 = vrot.slane %v122, %v126
  %v145 = vunpack.c.l.b16 %v106
  %v146 = vunpack.c.l.b16 %v107
  %v147 = vunpack.c.l.b16 %v108
  %v148 = vunpack.c.l.b16 %v109
  %v149 = vunpack.c.l.b16 %v110
  %v150 = vunpack.c.l.b16 %v111
  %v151 = vunpack.c.l.b16 %v112
  %v152 = vunpack.c.l.b16 %v113
  %v153 = vunpack.c.l.b16 %v114
  %v154 = vunpack.c.l.b16 %v115
  %v155 = vunpack.c.l.b16 %v116
  %v156 = vunpack.c.l.b16 %v117
  %v157 = vunpack.c.l.b16 %v118
  %v158 = vunpack.c.l.b16 %v119
  %v159 = vunpack.c.l.b16 %v120
  %v160 = vunpack.c.l.b16 %v121
  %v161 = vpack.c.b16 %v146, %v145
  %v162 = vpack.c.b16 %v148, %v147
  %v163 = vpack.c.b16 %v150, %v149
  %v164 = vpack.c.b16 %v152, %v151
  %v165 = vpack.c.b16 %v154, %v153
  %v166 = vpack.c.b16 %v156, %v155
  %v167 = vpack.c.b16 %v158, %v157
  %v168 = vpack.c.b16 %v160, %v159
  %177 = vmatprep.subr.bf16.mxu0 0
  %178 = vmatpush1.bf16.msra.mxu0 %v161
  %179 = vmatprep.subr.bf16.mxu0 0
  %180 = vmatpush1.bf16.msra.mxu0 %v162
  %181 = vmatprep.subr.bf16.mxu0 0
  %182 = vmatpush1.bf16.msra.mxu0 %v163
  %183 = vmatprep.subr.bf16.mxu0 0
  %184 = vmatpush1.bf16.msra.mxu0 %v164
  %185 = vmatprep.subr.bf16.mxu0 0
  %186 = vmatpush1.bf16.msra.mxu0 %v165
  %187 = vmatprep.subr.bf16.mxu0 0
  %188 = vmatpush1.bf16.msra.mxu0 %v166
  %189 = vmatprep.subr.bf16.mxu0 0
  %190 = vmatpush1.bf16.msra.mxu0 %v167
  %191 = vmatprep.subr.bf16.mxu0 0
  %192 = vmatpush1.bf16.msra.mxu0 %v168
  %193 = vmatprep.subr.bf16.mxu0 0
  %194 = vmatpush1.bf16.msra.mxu0 0
  %195 = vmatprep.subr.bf16.mxu0 0
  %196 = vmatpush1.bf16.msra.mxu0 0
  %197 = vmatprep.subr.bf16.mxu0 0
  %198 = vmatpush1.bf16.msra.mxu0 0
  %199 = vmatprep.subr.bf16.mxu0 0
  %200 = vmatpush1.bf16.msra.mxu0 0
  %201 = vmatprep.subr.bf16.mxu0 0
  %202 = vmatpush1.bf16.msra.mxu0 0
  %203 = vmatprep.subr.bf16.mxu0 0
  %204 = vmatpush1.bf16.msra.mxu0 0
  %205 = vmatprep.subr.bf16.mxu0 0
  %206 = vmatpush1.bf16.msra.mxu0 0
  %207 = vmatprep.subr.bf16.mxu0 0
  %208 = vmatpush1.bf16.msra.mxu0 0
  %209 = vmatprep.mubr.bf16.mxu0 0
  %210 = vmatmul.mubr.bf16.gmra.mrb[0].mxu0 %v105
  %v211 = vpop.f32.mrb[0].mxu0
  %v212 = vadd.f32 %v127, %v211
  %v213 = vpop.f32.mrb[0].mxu0
  %v214 = vpop.f32.mrb[0].mxu0
  %v215 = vpop.f32.mrb[0].mxu0
  %216 = vdwg.mxu0
  %v217 = vtanh.pop %v212
  %v218 = vpack.c.bf16 %v217, %v217
  %v219 = vld [vmem:[%s5] sm:$0xf]
  %v220 = vld [vmem:[%s5 + $0x4] sm:$0xf]
  %v221 = vld [vmem:[%s5 + $0x8] sm:$0xf]
  %v222 = vld [vmem:[%s5 + $0xc] sm:$0xf]
  %v223 = vld [vmem:[%s5 + $0x10] sm:$0xf]
  %v224 = vld [vmem:[%s5 + $0x14] sm:$0xf]
  %v225 = vld [vmem:[%s5 + $0x18] sm:$0xf]
  %v226 = vld [vmem:[%s5 + $0x1c] sm:$0xf]
  %v227 = vld [vmem:[%s6] sm:$0x1]
  %v229 = vlaneseq
  %v230 = vshrl.u32 %v229, 7
  %v231 = vsub.s32 0, %v230
  %v232 = vrot.slane %v227, %v231
  %v242 = vunpack.c.l.b16 %v219
  %v243 = vunpack.c.l.b16 %v220
  %v244 = vunpack.c.l.b16 %v221
  %v245 = vunpack.c.l.b16 %v222
  %v246 = vunpack.c.l.b16 %v223
  %v247 = vunpack.c.l.b16 %v224
  %v248 = vunpack.c.l.b16 %v225
  %v249 = vunpack.c.l.b16 %v226
  %v250 = vpack.c.b16 %v243, %v242
  %v251 = vpack.c.b16 %v245, %v244
  %v252 = vpack.c.b16 %v247, %v246
  %v253 = vpack.c.b16 %v249, %v248
  %vm258 = vcmask 523264
  %v260 = vsel %vm258, %v218, 0
  %262 = vmatprep.subr.bf16.mxu0 0
  %263 = vmatpush1.bf16.msra.mxu0 %v250
  %264 = vmatprep.subr.bf16.mxu0 0
  %265 = vmatpush1.bf16.msra.mxu0 %v251
  %266 = vmatprep.subr.bf16.mxu0 0
  %267 = vmatpush1.bf16.msra.mxu0 %v252
  %268 = vmatprep.subr.bf16.mxu0 0
  %269 = vmatpush1.bf16.msra.mxu0 %v253
  %270 = vmatprep.subr.bf16.mxu0 0
  %271 = vmatpush1.bf16.msra.mxu0 0
  %272 = vmatprep.subr.bf16.mxu0 0
  %273 = vmatpush1.bf16.msra.mxu0 0
  %274 = vmatprep.subr.bf16.mxu0 0
  %275 = vmatpush1.bf16.msra.mxu0 0
  %276 = vmatprep.subr.bf16.mxu0 0
  %277 = vmatpush1.bf16.msra.mxu0 0
  %278 = vmatprep.subr.bf16.mxu0 0
  %279 = vmatpush1.bf16.msra.mxu0 0
  %280 = vmatprep.subr.bf16.mxu0 0
  %281 = vmatpush1.bf16.msra.mxu0 0
  %282 = vmatprep.subr.bf16.mxu0 0
  %283 = vmatpush1.bf16.msra.mxu0 0
  %284 = vmatprep.subr.bf16.mxu0 0
  %285 = vmatpush1.bf16.msra.mxu0 0
  %286 = vmatprep.subr.bf16.mxu0 0
  %287 = vmatpush1.bf16.msra.mxu0 0
  %288 = vmatprep.subr.bf16.mxu0 0
  %289 = vmatpush1.bf16.msra.mxu0 0
  %290 = vmatprep.subr.bf16.mxu0 0
  %291 = vmatpush1.bf16.msra.mxu0 0
  %292 = vmatprep.subr.bf16.mxu0 0
  %293 = vmatpush1.bf16.msra.mxu0 0
  %294 = vmatprep.mubr.bf16.mxu0 0
  %295 = vmatmul.mubr.bf16.gmra.mrb[0].mxu0 %v260
  %v296 = vpop.f32.mrb[0].mxu0
  %v297 = vadd.f32 %v232, %v296
  %v298 = vpop.f32.mrb[0].mxu0
  %v299 = vpop.f32.mrb[0].mxu0
  %v300 = vpop.f32.mrb[0].mxu0
  %301 = vdwg.mxu0
  %v302 = vtanh.pop %v297
  %v303 = vld [vmem:[%s7] sm:$0x1]
  %v305 = vlaneseq
  %v306 = vshrl.u32 %v305, 7
  %v307 = vsub.s32 0, %v306
  %v308 = vrot.slane %v303, %v307
  %v310 = vmul.f32 %v302, %v308
  %vm311 = vcmask 261120
  %v312 = vsel %vm311, %v310, 0.0
  %313 = vadd.xlane.f32.xlu0 %v312
  %v314 = vpop.xlane.xlu0 %313
  %v315 = vld [vmem:[#allocation2] sm:$0x1]
  %v317 = vlaneseq
  %v318 = vshrl.u32 %v317, 7
  %v319 = vsub.s32 0, %v318
  %v320 = vrot.slane %v315, %v319
  %v322 = vadd.f32 %v314, %v320
  %v323 = vxor.u32 %v322, 2147483648
  %v324 = vmul.f32 %v323, 1.442695
  %v325 = vpow.pop %v324
  %v326 = vadd.f32 %v325, 1.0
  %v327 = vrcp.pop %v326
  %v328 = vmul.f32 1.0, %v327
  %vm329 = vcmask 7168
  %330 = vst.msk [vmem:[%s9] sm:$0xff] %vm329, %v328
  // Predicated region
  $region38: #{net_forward.1} parent=0 // pred_check
    _
  $region39: #{net_forward.1} parent=0 // pred_check_branch
    %332 = sbr.rel (0) target = $region41
  $region40: #{net_forward.1} parent=0 // pred_region
    _
  $region41: #{net_forward.1} parent=0 // pred_fallthru
    _
  // Predicated region
  $region42: #{net_forward.1} parent=0 // pred_check
    _
  $region43: #{net_forward.1} parent=0 // pred_check_branch
    %334 = sbr.rel (0) target = $region45
  $region44: #{net_forward.1} parent=0 // pred_region
    _
  $region45: #{net_forward.1} parent=0 // pred_fallthru
    _

</llo_original>
